<compile_context>
chip_gen: v5e
topology: v5e:2x2
jax: 0.10.0
libtpu: 0.0.40
codegen_flags: <defaults>
</compile_context>

<pallas_src>
import functools

import jax
import jax.numpy as jnp
from jax.experimental import pallas as pl
from jax.experimental.pallas import tpu as pltpu


def mlp_kernel(x_ref, w1_ref, b1_ref, w2_ref, b2_ref, w3_ref, b3_ref, o_ref):
    """Fused (Linear -> ReLU) x2 -> Linear for one batch tile.

    x arrives in f32 (no wrapper-side cast pass); the f32->bf16 cast runs on
    the VPU and hides under the input DMA.  Matmul feeds are bf16 (MXU-native
    on v5e/v6e/v7x) with explicit f32 accumulation; the bias-add / ReLU
    epilogue stays in f32 on the VPU.
    """
    x = x_ref[...].astype(jnp.bfloat16)                               # (tb, L)
    h1 = jnp.dot(x, w1_ref[...], preferred_element_type=jnp.float32)
    h1 = jnp.maximum(h1 + b1_ref[...], 0.0)                           # (tb, 128) f32
    h2 = jnp.dot(h1.astype(jnp.bfloat16), w2_ref[...],
                 preferred_element_type=jnp.float32)
    h2 = jnp.maximum(h2 + b2_ref[...], 0.0)                           # (tb, 128) f32
    o = jnp.dot(h2.astype(jnp.bfloat16), w3_ref[...],
                preferred_element_type=jnp.float32)
    o_ref[...] = (o + b3_ref[...]).astype(o_ref.dtype)                # (tb, C_pad) bf16


def _round_up(x, m):
    return ((x + m - 1) // m) * m


def _choose_batch_tile(batch):
    """Single grid step for small/moderate batches (per-step pipeline overhead
    dominates a ~0.1-0.5 MB tile); 2048-row tiles for large batches so each
    step moves ~2 MB and the grid stays short."""
    if batch <= 2048:
        return batch          # block first dim == full array dim -> always legal
    return 2048


@functools.partial(jax.jit, static_argnames=("tb", "num_classes"))
def _mlp_pallas(x, w1, b1, w2, b2, w3, b3, *, tb, num_classes):
    batch, sig_len = x.shape
    h1 = w1.shape[1]
    h2p = w2.shape[1]          # hidden-2, already padded to a 128 multiple
    c_pad = w3.shape[1]        # class dim, already padded to a 128-lane slab

    grid = (pl.cdiv(batch, tb),)

    grid_spec = pltpu.PrefetchScalarGridSpec(
        num_scalar_prefetch=0,
        grid=grid,
        in_specs=[
            # Activations: batch-tiled, kept in f32 (cast happens in-kernel).
            pl.BlockSpec((tb, sig_len), lambda i: (i, 0)),
            # Weights/biases: constant block index -> resident in VMEM, no
            # re-copy after the first grid step.
            pl.BlockSpec((sig_len, h1), lambda i: (0, 0)),
            pl.BlockSpec((1, h1), lambda i: (0, 0)),
            pl.BlockSpec((h1, h2p), lambda i: (0, 0)),
            pl.BlockSpec((1, h2p), lambda i: (0, 0)),
            pl.BlockSpec((h2p, c_pad), lambda i: (0, 0)),
            pl.BlockSpec((1, c_pad), lambda i: (0, 0)),
        ],
        out_specs=pl.BlockSpec((tb, c_pad), lambda i: (i, 0)),
    )

    flops = 2 * batch * (sig_len * h1 + h1 * h2p + h2p * c_pad)
    bytes_accessed = (
        batch * sig_len * 4                              # f32 activations in
        + batch * c_pad * 2                              # bf16 logits out
        + (sig_len * h1 + h1 * h2p + h2p * c_pad) * 2    # bf16 weights
        + (h1 + h2p + c_pad) * 4                         # f32 biases
    )

    out = pl.pallas_call(
        mlp_kernel,
        out_shape=jax.ShapeDtypeStruct((batch, c_pad), jnp.bfloat16),
        grid_spec=grid_spec,
        compiler_params=pltpu.CompilerParams(
            dimension_semantics=("parallel",),
        ),
        cost_estimate=pl.CostEstimate(
            flops=flops, transcendentals=0, bytes_accessed=bytes_accessed),
    )(x, w1, b1, w2, b2, w3, b3)

    # Slice the tiny class range off the lane-dense slab and upcast (fused in
    # the same jit, so it is one small copy, not an extra dispatch).
    return out[:, :num_classes].astype(jnp.float32)


def prepare_params(w1, b1, w2, b2, w3, b3):
    """One-time weight prep, off the per-call hot path.

    - hidden-2 width padded to a 128 multiple (zero cols in w2/b2, zero rows in
      w3) so the f32 intermediate and the third matmul use full 128-lane vregs;
    - class dim padded to a 128-lane slab so the output store is unmasked;
    - weights cast to bf16 (MXU feed), biases kept f32.
    Padded columns are exact zeros, so results are unchanged after slicing.
    """
    h2 = w2.shape[1]
    c = w3.shape[1]
    h2_pad = _round_up(max(h2, 128), 128)
    c_pad = _round_up(max(c, 128), 128)
    w2p = jnp.pad(w2, ((0, 0), (0, h2_pad - h2)))
    b2p = jnp.pad(b2, ((0, 0), (0, h2_pad - h2)))
    w3p = jnp.pad(w3, ((0, h2_pad - h2), (0, c_pad - c)))
    b3p = jnp.pad(b3, ((0, 0), (0, c_pad - c)))
    return (w1.astype(jnp.bfloat16), b1,
            w2p.astype(jnp.bfloat16), b2p,
            w3p.astype(jnp.bfloat16), b3p)


def mlp_forward(x, params, num_classes):
    """x: (B, L) float32 (already flattened).  params from prepare_params()."""
    tb = _choose_batch_tile(x.shape[0])
    return _mlp_pallas(x, *params, tb=tb, num_classes=num_classes)


def init_linear(key, fan_in, fan_out):
    """PyTorch-style init: U(-1/sqrt(fan_in), 1/sqrt(fan_in)).

    Returns W with shape (fan_in, fan_out) (already transposed for x @ W) and
    bias with shape (1, fan_out), both f32.
    """
    kw, kb = jax.random.split(key)
    bound = 1.0 / (fan_in ** 0.5)
    w = jax.random.uniform(kw, (fan_in, fan_out), jnp.float32, -bound, bound)
    b = jax.random.uniform(kb, (1, fan_out), jnp.float32, -bound, bound)
    return w, b


def reference_forward(x, w1, b1, w2, b2, w3, b3):
    """Pure-JAX reference mirroring the kernel's numerics (bf16 feeds, f32 acc)."""
    def bf(v):
        return v.astype(jnp.bfloat16).astype(jnp.float32)
    a1 = jnp.maximum(bf(x) @ bf(w1) + b1, 0.0)
    a2 = jnp.maximum(bf(a1) @ bf(w2) + b2, 0.0)
    return bf(a2) @ bf(w3) + b3


if __name__ == "__main__":
    B = 32                    # BATCH_SIZE in the original script
    SIGNAL_LENGTH = 256       # ECG signal length
    NUM_CLASSES = 4           # 'ecg-four-classes'

    key = jax.random.PRNGKey(0)
    kx, k1, k2, k3 = jax.random.split(key, 4)

    # Input like the PyTorch dataset produces: (B, 1, signal_length) float32.
    x_ncl = jax.random.normal(kx, (B, 1, SIGNAL_LENGTH), jnp.float32)
    x = x_ncl.reshape(B, -1)          # forward(): x = x.view(x.size(0), -1)

    w1, b1 = init_linear(k1, SIGNAL_LENGTH, 128)
    w2, b2 = init_linear(k2, 128, 64)
    w3, b3 = init_linear(k3, 64, NUM_CLASSES)

    # Hoisted weight prep (bf16 cast + padding) -- done once, not per call.
    params = jax.block_until_ready(prepare_params(w1, b1, w2, b2, w3, b3))

    out = jax.block_until_ready(mlp_forward(x, params, NUM_CLASSES))
    ref = reference_forward(x, w1, b1, w2, b2, w3, b3)
    assert out.shape == (B, NUM_CLASSES)
    assert jnp.allclose(out, ref, atol=2e-2, rtol=2e-2), \
        float(jnp.max(jnp.abs(out - ref)))

    # Arbitrary (non-tile-aligned) batch size also works: the batch block
    # equals the full batch dim here, so no padding is ever materialized.
    B2 = 10
    x2 = jax.random.normal(kx, (B2, SIGNAL_LENGTH), jnp.float32)
    out2 = jax.block_until_ready(mlp_forward(x2, params, NUM_CLASSES))
    ref2 = reference_forward(x2, w1, b1, w2, b2, w3, b3)
    assert out2.shape == (B2, NUM_CLASSES)
    assert jnp.allclose(out2, ref2, atol=2e-2, rtol=2e-2)

    print("KERNEL_OK")
</pallas_src>

<mosaic_0001>
module attributes {stable_mosaic.version = 11 : i64} {
  func.func @mlp_kernel(%arg0: i32, %arg1: memref<32x256xf32, #tpu.memory_space<vmem>>, %arg2: memref<256x128xbf16, #tpu.memory_space<vmem>>, %arg3: memref<1x128xf32, #tpu.memory_space<vmem>>, %arg4: memref<128x128xbf16, #tpu.memory_space<vmem>>, %arg5: memref<1x128xf32, #tpu.memory_space<vmem>>, %arg6: memref<128x128xbf16, #tpu.memory_space<vmem>>, %arg7: memref<1x128xf32, #tpu.memory_space<vmem>>, %arg8: memref<32x128xbf16, #tpu.memory_space<vmem>>) attributes {dimension_semantics = [#tpu.dimension_semantics<parallel>], iteration_bounds = array<i64: 1>, scalar_prefetch = 0 : i64, scratch_operands = 0 : i64, tpu.core_type = #tpu.core_type<tc>, window_params = [{transform_indices = @transform_0, window_bounds = array<i64: 32, 256>}, {pipeline_mode = #tpu.pipeline_mode<synchronous>, transform_indices = @transform_1, window_bounds = array<i64: 256, 128>}, {pipeline_mode = #tpu.pipeline_mode<synchronous>, transform_indices = @transform_2, window_bounds = array<i64: 1, 128>}, {pipeline_mode = #tpu.pipeline_mode<synchronous>, transform_indices = @transform_3, window_bounds = array<i64: 128, 128>}, {pipeline_mode = #tpu.pipeline_mode<synchronous>, transform_indices = @transform_4, window_bounds = array<i64: 1, 128>}, {pipeline_mode = #tpu.pipeline_mode<synchronous>, transform_indices = @transform_5, window_bounds = array<i64: 128, 128>}, {pipeline_mode = #tpu.pipeline_mode<synchronous>, transform_indices = @transform_6, window_bounds = array<i64: 1, 128>}, {transform_indices = @transform_7, window_bounds = array<i64: 32, 128>}]} {
    %c0 = arith.constant 0 : index
    %c0_0 = arith.constant 0 : index
    %0 = vector.load %arg1[%c0, %c0_0] : memref<32x256xf32, #tpu.memory_space<vmem>>, vector<32x256xf32>
    %1 = arith.truncf %0 : vector<32x256xf32> to vector<32x256xbf16>
    %c0_1 = arith.constant 0 : index
    %c0_2 = arith.constant 0 : index
    %2 = vector.load %arg2[%c0_1, %c0_2] : memref<256x128xbf16, #tpu.memory_space<vmem>>, vector<256x128xbf16>
    %cst = arith.constant dense<0.000000e+00> : vector<32x128xf32>
    %3 = tpu.matmul %1, %2, %cst {dimension_numbers = #tpu.dot_dimension_numbers<[1], [0], [0], [1], [0, 0, 1, 1], [], []>} : vector<32x256xbf16>, vector<256x128xbf16>, vector<32x128xf32> -> vector<32x128xf32>
    %c0_3 = arith.constant 0 : index
    %c0_4 = arith.constant 0 : index
    %4 = vector.load %arg3[%c0_3, %c0_4] : memref<1x128xf32, #tpu.memory_space<vmem>>, vector<1x128xf32>
    %5 = vector.broadcast %4 : vector<1x128xf32> to vector<32x128xf32>
    %6 = arith.addf %3, %5 : vector<32x128xf32>
    %cst_5 = arith.constant 0.000000e+00 : f32
    %7 = vector.broadcast %cst_5 : f32 to vector<32x128xf32>
    %8 = arith.maximumf %6, %7 : vector<32x128xf32>
    %9 = arith.truncf %8 : vector<32x128xf32> to vector<32x128xbf16>
    %c0_6 = arith.constant 0 : index
    %c0_7 = arith.constant 0 : index
    %10 = vector.load %arg4[%c0_6, %c0_7] : memref<128x128xbf16, #tpu.memory_space<vmem>>, vector<128x128xbf16>
    %cst_8 = arith.constant dense<0.000000e+00> : vector<32x128xf32>
    %11 = tpu.matmul %9, %10, %cst_8 {dimension_numbers = #tpu.dot_dimension_numbers<[1], [0], [0], [1], [0, 0, 1, 1], [], []>} : vector<32x128xbf16>, vector<128x128xbf16>, vector<32x128xf32> -> vector<32x128xf32>
    %c0_9 = arith.constant 0 : index
    %c0_10 = arith.constant 0 : index
    %12 = vector.load %arg5[%c0_9, %c0_10] : memref<1x128xf32, #tpu.memory_space<vmem>>, vector<1x128xf32>
    %13 = vector.broadcast %12 : vector<1x128xf32> to vector<32x128xf32>
    %14 = arith.addf %11, %13 : vector<32x128xf32>
    %cst_11 = arith.constant 0.000000e+00 : f32
    %15 = vector.broadcast %cst_11 : f32 to vector<32x128xf32>
    %16 = arith.maximumf %14, %15 : vector<32x128xf32>
    %17 = arith.truncf %16 : vector<32x128xf32> to vector<32x128xbf16>
    %c0_12 = arith.constant 0 : index
    %c0_13 = arith.constant 0 : index
    %18 = vector.load %arg6[%c0_12, %c0_13] : memref<128x128xbf16, #tpu.memory_space<vmem>>, vector<128x128xbf16>
    %cst_14 = arith.constant dense<0.000000e+00> : vector<32x128xf32>
    %19 = tpu.matmul %17, %18, %cst_14 {dimension_numbers = #tpu.dot_dimension_numbers<[1], [0], [0], [1], [0, 0, 1, 1], [], []>} : vector<32x128xbf16>, vector<128x128xbf16>, vector<32x128xf32> -> vector<32x128xf32>
    %c0_15 = arith.constant 0 : index
    %c0_16 = arith.constant 0 : index
    %20 = vector.load %arg7[%c0_15, %c0_16] : memref<1x128xf32, #tpu.memory_space<vmem>>, vector<1x128xf32>
    %21 = vector.broadcast %20 : vector<1x128xf32> to vector<32x128xf32>
    %22 = arith.addf %19, %21 : vector<32x128xf32>
    %23 = arith.truncf %22 : vector<32x128xf32> to vector<32x128xbf16>
    %c0_17 = arith.constant 0 : index
    %c0_18 = arith.constant 0 : index
    %24 = vector.load %arg8[%c0_17, %c0_18] : memref<32x128xbf16, #tpu.memory_space<vmem>>, vector<32x128xbf16>
    tpu.vector_store %arg8[%c0_17, %c0_18], %23 {strides = array<i32>} : memref<32x128xbf16, #tpu.memory_space<vmem>>, vector<32x128xbf16>,
    return
  }
  func.func @transform_0(%arg0: i32) -> (i32, i32) {
    %c0_i32 = arith.constant 0 : i32
    %c0_i32_0 = arith.constant 0 : i32
    return %arg0, %c0_i32 : i32, i32
  }
  func.func @transform_1(%arg0: i32) -> (i32, i32) {
    %c0_i32 = arith.constant 0 : i32
    %c0_i32_0 = arith.constant 0 : i32
    %c0_i32_1 = arith.constant 0 : i32
    return %c0_i32, %c0_i32_0 : i32, i32
  }
  func.func @transform_2(%arg0: i32) -> (i32, i32) {
    %c0_i32 = arith.constant 0 : i32
    %c0_i32_0 = arith.constant 0 : i32
    %c0_i32_1 = arith.constant 0 : i32
    return %c0_i32, %c0_i32_0 : i32, i32
  }
  func.func @transform_3(%arg0: i32) -> (i32, i32) {
    %c0_i32 = arith.constant 0 : i32
    %c0_i32_0 = arith.constant 0 : i32
    %c0_i32_1 = arith.constant 0 : i32
    return %c0_i32, %c0_i32_0 : i32, i32
  }
  func.func @transform_4(%arg0: i32) -> (i32, i32) {
    %c0_i32 = arith.constant 0 : i32
    %c0_i32_0 = arith.constant 0 : i32
    %c0_i32_1 = arith.constant 0 : i32
    return %c0_i32, %c0_i32_0 : i32, i32
  }
  func.func @transform_5(%arg0: i32) -> (i32, i32) {
    %c0_i32 = arith.constant 0 : i32
    %c0_i32_0 = arith.constant 0 : i32
    %c0_i32_1 = arith.constant 0 : i32
    return %c0_i32, %c0_i32_0 : i32, i32
  }
  func.func @transform_6(%arg0: i32) -> (i32, i32) {
    %c0_i32 = arith.constant 0 : i32
    %c0_i32_0 = arith.constant 0 : i32
    %c0_i32_1 = arith.constant 0 : i32
    return %c0_i32, %c0_i32_0 : i32, i32
  }
  func.func @transform_7(%arg0: i32) -> (i32, i32) {
    %c0_i32 = arith.constant 0 : i32
    %c0_i32_0 = arith.constant 0 : i32
    return %arg0, %c0_i32 : i32, i32
  }
}

</mosaic_0001>

<llo_original>
// kernel: _mlp_pallas.1
$region0: #{_mlp_pallas.1}
  #allocation0 [shape = 'u32[]', space=smem, size = 0x4, offset = 0x4, fixed_abs, tag = 'smem constant byte address 0x4 - core index']
  #allocation1 [shape = 'u32[72,128]{1,0:T(1,128)}', space=vmem, size = 0x9000, scoped, tag = 'internal scratch']
  %s0 = inlined_call_operand.hbm [shape: f32[32,256], index: 0, kind: input, shape index: {}]
  %s1 = inlined_call_operand.hbm [shape: bf16[256,128], index: 1, kind: input, shape index: {}]
  %s2 = inlined_call_operand.vmem [shape: f32[1,128], index: 2, kind: input, shape index: {}]
  %s3 = inlined_call_operand.hbm [shape: bf16[128,128], index: 3, kind: input, shape index: {}]
  %s4 = inlined_call_operand.vmem [shape: f32[1,128], index: 4, kind: input, shape index: {}]
  %s5 = inlined_call_operand.hbm [shape: bf16[128,128], index: 5, kind: input, shape index: {}]
  %s6 = inlined_call_operand.vmem [shape: f32[1,128], index: 6, kind: input, shape index: {}]
  %s7 = inlined_call_operand.vmem [shape: bf16[32,128], index: 7, kind: output, shape index: {}]
  %s8 = sld [smem:[#allocation0]]
  $region54: #{_mlp_pallas.1} parent=0
    _
  %s10 = ssub.s32 1, %s8
  %s11 = scalar_select 0, %s10, %s8
  $region1: #{_mlp_pallas.1} parent=0
    #allocation2 [shape = 'u8[32768]{0}', space=vmem, size = 0x8000, scoped, tag = 'input window, operand 0, single buffered']
    #allocation3 [shape = 's32[1]{0}', space=sflag, size = 0x4, scoped, tag = 'scoped memory for _mlp_pallas.1']
    #allocation4 [shape = 'u8[65536]{0}', space=vmem, size = 0x10000, scoped, tag = 'input window, operand 1, single buffered']
    #allocation5 [shape = 's32[1]{0}', space=sflag, size = 0x4, scoped, tag = 'scoped memory for _mlp_pallas.1']
    #allocation6 [shape = 'u8[32768]{0}', space=vmem, size = 0x8000, scoped, tag = 'input window, operand 3, single buffered']
    #allocation7 [shape = 'u8[32768]{0}', space=vmem, size = 0x8000, scoped, tag = 'input window, operand 5, single buffered']
    #allocation8 [shape = 's32[1]{0}', space=sflag, size = 0x4, scoped, tag = 'scoped memory for _mlp_pallas.1']
    %12 = vsyncpa [#allocation3], 0
    %13 = vsyncpa [#allocation5], 0
    %14 = vsyncpa [#allocation8], 0
    // Predicated region
    $region2: #{_mlp_pallas.1} parent=1 // pred_check
      _
    $region3: #{_mlp_pallas.1} parent=1 // pred_check_branch
      %16 = sbr.rel (0) target = $region5
    $region4: #{_mlp_pallas.1} parent=1 // pred_region
      %18 = vsyncadd [#allocation3], 0
      %s19 = sshll.u32 %s0, 4
      %s20 = int_to_ptr.hbm [resolvable:$true] %s19
      %s21 = sshll.u32 [#allocation2], 4
      %s22 = int_to_ptr.vmem [resolvable:$true] %s21
      %27 = dma.hbm_to_vmem [thread:$0]  %s20, 1024, %s22, [#allocation3], 256, 256, 16
    $region5: #{_mlp_pallas.1} parent=1 // pred_fallthru
      _
    // Predicated region
    $region6: #{_mlp_pallas.1} parent=1 // pred_check
      _
    $region7: #{_mlp_pallas.1} parent=1 // pred_check_branch
      %29 = sbr.rel (0) target = $region9
    $region8: #{_mlp_pallas.1} parent=1 // pred_region
      %31 = vsyncadd [#allocation5], 0
      %s32 = sshll.u32 %s1, 4
      %s33 = int_to_ptr.hbm [resolvable:$true] %s32
      %s34 = sshll.u32 [#allocation4], 4
      %s35 = int_to_ptr.vmem [resolvable:$true] %s34
      %40 = dma.hbm_to_vmem [thread:$0]  %s33, 2048, %s35, [#allocation5], 64, 64, 4
    $region9: #{_mlp_pallas.1} parent=1 // pred_fallthru
      _
    // Predicated region
    $region10: #{_mlp_pallas.1} parent=1 // pred_check
      _
    $region11: #{_mlp_pallas.1} parent=1 // pred_check_branch
      %42 = sbr.rel (0) target = $region13
    $region12: #{_mlp_pallas.1} parent=1 // pred_region
      _
    $region13: #{_mlp_pallas.1} parent=1 // pred_fallthru
      _
    // Predicated region
    $region14: #{_mlp_pallas.1} parent=1 // pred_check
      _
    $region15: #{_mlp_pallas.1} parent=1 // pred_check_branch
      %44 = sbr.rel (0) target = $region17
    $region16: #{_mlp_pallas.1} parent=1 // pred_region
      %46 = vsyncadd [#allocation5], 0
      %s47 = sshll.u32 %s3, 4
      %s48 = int_to_ptr.hbm [resolvable:$true] %s47
      %s49 = sshll.u32 [#allocation6], 4
      %s50 = int_to_ptr.vmem [resolvable:$true] %s49
      %55 = dma.hbm_to_vmem [thread:$0]  %s48, 1024, %s50, [#allocation5], 64, 64, 4
    $region17: #{_mlp_pallas.1} parent=1 // pred_fallthru
      _
    // Predicated region
    $region18: #{_mlp_pallas.1} parent=1 // pred_check
      _
    $region19: #{_mlp_pallas.1} parent=1 // pred_check_branch
      %57 = sbr.rel (0) target = $region21
    $region20: #{_mlp_pallas.1} parent=1 // pred_region
      _
    $region21: #{_mlp_pallas.1} parent=1 // pred_fallthru
      _
    // Predicated region
    $region22: #{_mlp_pallas.1} parent=1 // pred_check
      _
    $region23: #{_mlp_pallas.1} parent=1 // pred_check_branch
      %59 = sbr.rel (0) target = $region25
    $region24: #{_mlp_pallas.1} parent=1 // pred_region
      %61 = vsyncadd [#allocation8], 0
      %s62 = sshll.u32 %s5, 4
      %s63 = int_to_ptr.hbm [resolvable:$true] %s62
      %s64 = sshll.u32 [#allocation7], 4
      %s65 = int_to_ptr.vmem [resolvable:$true] %s64
      %70 = dma.hbm_to_vmem [thread:$0]  %s63, 1024, %s65, [#allocation8], 64, 64, 4
    $region25: #{_mlp_pallas.1} parent=1 // pred_fallthru
      _
    // Predicated region
    $region26: #{_mlp_pallas.1} parent=1 // pred_check
      _
    $region27: #{_mlp_pallas.1} parent=1 // pred_check_branch
      %72 = sbr.rel (0) target = $region29
    $region28: #{_mlp_pallas.1} parent=1 // pred_region
      _
    $region29: #{_mlp_pallas.1} parent=1 // pred_fallthru
      _
    // Predicated region
    $region30: #{_mlp_pallas.1} parent=1 // pred_check
      _
    $region31: #{_mlp_pallas.1} parent=1 // pred_check_branch
      %74 = sbr.rel (0) target = $region33
    $region32: #{_mlp_pallas.1} parent=1 // pred_region
      %76 = dma.done [#allocation3], 1024
    $region33: #{_mlp_pallas.1} parent=1 // pred_fallthru
      _
    // Predicated region
    $region34: #{_mlp_pallas.1} parent=1 // pred_check
      _
    $region35: #{_mlp_pallas.1} parent=1 // pred_check_branch
      %78 = sbr.rel (0) target = $region37
    $region36: #{_mlp_pallas.1} parent=1 // pred_region
      %80 = dma.done [#allocation5], 2048
    $region37: #{_mlp_pallas.1} parent=1 // pred_fallthru
      _
    // Predicated region
    $region38: #{_mlp_pallas.1} parent=1 // pred_check
      _
    $region39: #{_mlp_pallas.1} parent=1 // pred_check_branch
      %82 = sbr.rel (0) target = $region41
    $region40: #{_mlp_pallas.1} parent=1 // pred_region
      %84 = dma.done [#allocation5], 1024
    $region41: #{_mlp_pallas.1} parent=1 // pred_fallthru
      _
    // Predicated region
    $region42: #{_mlp_pallas.1} parent=1 // pred_check
      _
    $region43: #{_mlp_pallas.1} parent=1 // pred_check_branch
      %86 = sbr.rel (0) target = $region45
    $region44: #{_mlp_pallas.1} parent=1 // pred_region
      %88 = dma.done [#allocation8], 1024
    $region45: #{_mlp_pallas.1} parent=1 // pred_fallthru
      _
    %v89 = vld [vmem:[#allocation2] sm:$0xff]
    %v90 = vld [vmem:[#allocation2 + $0x8] sm:$0xff]
    %v91 = vld [vmem:[#allocation2 + $0x10] sm:$0xff]
    %v92 = vld [vmem:[#allocation2 + $0x18] sm:$0xff]
    %v93 = vld [vmem:[#allocation2 + $0x20] sm:$0xff]
    %v94 = vld [vmem:[#allocation2 + $0x28] sm:$0xff]
    %v95 = vld [vmem:[#allocation2 + $0x30] sm:$0xff]
    %v96 = vld [vmem:[#allocation2 + $0x38] sm:$0xff]
    %v97 = vpack.c.bf16 %v91, %v89
    %v98 = vpack.c.bf16 %v92, %v90
    %v99 = vpack.c.bf16 %v95, %v93
    %v100 = vpack.c.bf16 %v96, %v94
    %v101 = vld [vmem:[#allocation4] sm:$0xf]
    %v102 = vld [vmem:[#allocation4 + $0x4] sm:$0xf]
    %v103 = vld [vmem:[#allocation4 + $0x8] sm:$0xf]
    %v104 = vld [vmem:[#allocation4 + $0xc] sm:$0xf]
    %v105 = vld [vmem:[#allocation4 + $0x10] sm:$0xf]
    %v106 = vld [vmem:[#allocation4 + $0x14] sm:$0xf]
    %v107 = vld [vmem:[#allocation4 + $0x18] sm:$0xf]
    %v108 = vld [vmem:[#allocation4 + $0x1c] sm:$0xf]
    %v109 = vld [vmem:[#allocation4 + $0x20] sm:$0xf]
    %v110 = vld [vmem:[#allocation4 + $0x24] sm:$0xf]
    %v111 = vld [vmem:[#allocation4 + $0x28] sm:$0xf]
    %v112 = vld [vmem:[#allocation4 + $0x2c] sm:$0xf]
    %v113 = vld [vmem:[#allocation4 + $0x30] sm:$0xf]
    %v114 = vld [vmem:[#allocation4 + $0x34] sm:$0xf]
    %v115 = vld [vmem:[#allocation4 + $0x38] sm:$0xf]
    %v116 = vld [vmem:[#allocation4 + $0x3c] sm:$0xf]
    %v117 = vld [vmem:[#allocation4 + $0x40] sm:$0xf]
    %v118 = vld [vmem:[#allocation4 + $0x44] sm:$0xf]
    %v119 = vld [vmem:[#allocation4 + $0x48] sm:$0xf]
    %v120 = vld [vmem:[#allocation4 + $0x4c] sm:$0xf]
    %v121 = vld [vmem:[#allocation4 + $0x50] sm:$0xf]
    %v122 = vld [vmem:[#allocation4 + $0x54] sm:$0xf]
    %v123 = vld [vmem:[#allocation4 + $0x58] sm:$0xf]
    %v124 = vld [vmem:[#allocation4 + $0x5c] sm:$0xf]
    %v125 = vld [vmem:[#allocation4 + $0x60] sm:$0xf]
    %v126 = vld [vmem:[#allocation4 + $0x64] sm:$0xf]
    %v127 = vld [vmem:[#allocation4 + $0x68] sm:$0xf]
    %v128 = vld [vmem:[#allocation4 + $0x6c] sm:$0xf]
    %v129 = vld [vmem:[#allocation4 + $0x70] sm:$0xf]
    %v130 = vld [vmem:[#allocation4 + $0x74] sm:$0xf]
    %v131 = vld [vmem:[#allocation4 + $0x78] sm:$0xf]
    %v132 = vld [vmem:[#allocation4 + $0x7c] sm:$0xf]
    %v133 = vld [vmem:[%s2] sm:$0x1]
    %v135 = vperm.slane %v133, 0
    %v169 = vunpack.c.l.b16 %v101
    %v170 = vunpack.c.l.b16 %v102
    %v171 = vunpack.c.l.b16 %v103
    %v172 = vunpack.c.l.b16 %v104
    %v173 = vunpack.c.l.b16 %v105
    %v174 = vunpack.c.l.b16 %v106
    %v175 = vunpack.c.l.b16 %v107
    %v176 = vunpack.c.l.b16 %v108
    %v177 = vunpack.c.l.b16 %v109
    %v178 = vunpack.c.l.b16 %v110
    %v179 = vunpack.c.l.b16 %v111
    %v180 = vunpack.c.l.b16 %v112
    %v181 = vunpack.c.l.b16 %v113
    %v182 = vunpack.c.l.b16 %v114
    %v183 = vunpack.c.l.b16 %v115
    %v184 = vunpack.c.l.b16 %v116
    %v185 = vunpack.c.l.b16 %v117
    %v186 = vunpack.c.l.b16 %v118
    %v187 = vunpack.c.l.b16 %v119
    %v188 = vunpack.c.l.b16 %v120
    %v189 = vunpack.c.l.b16 %v121
    %v190 = vunpack.c.l.b16 %v122
    %v191 = vunpack.c.l.b16 %v123
    %v192 = vunpack.c.l.b16 %v124
    %v193 = vunpack.c.l.b16 %v125
    %v194 = vunpack.c.l.b16 %v126
    %v195 = vunpack.c.l.b16 %v127
    %v196 = vunpack.c.l.b16 %v128
    %v197 = vunpack.c.l.b16 %v129
    %v198 = vunpack.c.l.b16 %v130
    %v199 = vunpack.c.l.b16 %v131
    %v200 = vunpack.c.l.b16 %v132
    %v201 = vpack.c.b16 %v170, %v169
    %v202 = vpack.c.b16 %v172, %v171
    %v203 = vpack.c.b16 %v174, %v173
    %v204 = vpack.c.b16 %v176, %v175
    %v205 = vpack.c.b16 %v178, %v177
    %v206 = vpack.c.b16 %v180, %v179
    %v207 = vpack.c.b16 %v182, %v181
    %v208 = vpack.c.b16 %v184, %v183
    %v209 = vpack.c.b16 %v186, %v185
    %v210 = vpack.c.b16 %v188, %v187
    %v211 = vpack.c.b16 %v190, %v189
    %v212 = vpack.c.b16 %v192, %v191
    %v213 = vpack.c.b16 %v194, %v193
    %v214 = vpack.c.b16 %v196, %v195
    %v215 = vpack.c.b16 %v198, %v197
    %v216 = vpack.c.b16 %v200, %v199
    %233 = vmatpush.bf16.msra.mxu0 %v208
    %234 = vmatpush.bf16.msra.mxu0 %v207
    %235 = vmatpush.bf16.msra.mxu0 %v206
    %236 = vmatpush.bf16.msra.mxu0 %v205
    %237 = vmatpush.bf16.msra.mxu0 %v204
    %238 = vmatpush.bf16.msra.mxu0 %v203
    %239 = vmatpush.bf16.msra.mxu0 %v202
    %240 = vmatpush.bf16.msra.mxu0 %v201
    %241 = vmatmul.bf16.gmra.mxu0 %v97
    %v242 = vpop.f32.mrf.mxu0
    %v243 = vadd.f32 %v135, %v242
    %v244 = vpop.f32.mrf.mxu0
    %v245 = vadd.f32 %v135, %v244
    %246 = vmatmul.bf16.gmra.mxu0 %v99
    %v247 = vpop.f32.mrf.mxu0
    %v248 = vadd.f32 %v135, %v247
    %v249 = vpop.f32.mrf.mxu0
    %v250 = vadd.f32 %v135, %v249
    %251 = vdwg.mxu0
    %252 = vmatpush.bf16.msra.mxu0 %v216
    %253 = vmatpush.bf16.msra.mxu0 %v215
    %254 = vmatpush.bf16.msra.mxu0 %v214
    %255 = vmatpush.bf16.msra.mxu0 %v213
    %256 = vmatpush.bf16.msra.mxu0 %v212
    %257 = vmatpush.bf16.msra.mxu0 %v211
    %258 = vmatpush.bf16.msra.mxu0 %v210
    %259 = vmatpush.bf16.msra.mxu0 %v209
    %260 = vmatmul.bf16.gmra.mxu0 %v98
    %v261 = vpop.f32.mrf.mxu0
    %v262 = vadd.f32 %v243, %v261
    %v263 = vpop.f32.mrf.mxu0
    %v264 = vadd.f32 %v245, %v263
    %265 = vmatmul.bf16.gmra.mxu0 %v100
    %v266 = vpop.f32.mrf.mxu0
    %v267 = vadd.f32 %v248, %v266
    %v268 = vpop.f32.mrf.mxu0
    %v269 = vadd.f32 %v250, %v268
    %270 = vdwg.mxu0
    %v271 = vmax.f32 %v262, 0.0
    %v272 = vmax.f32 %v264, 0.0
    %v273 = vmax.f32 %v267, 0.0
    %v274 = vmax.f32 %v269, 0.0
    %v275 = vpack.c.bf16 %v272, %v271
    %v276 = vpack.c.bf16 %v274, %v273
    %v277 = vld [vmem:[#allocation6] sm:$0xf]
    %v278 = vld [vmem:[#allocation6 + $0x4] sm:$0xf]
    %v279 = vld [vmem:[#allocation6 + $0x8] sm:$0xf]
    %v280 = vld [vmem:[#allocation6 + $0xc] sm:$0xf]
    %v281 = vld [vmem:[#allocation6 + $0x10] sm:$0xf]
    %v282 = vld [vmem:[#allocation6 + $0x14] sm:$0xf]
    %v283 = vld [vmem:[#allocation6 + $0x18] sm:$0xf]
    %v284 = vld [vmem:[#allocation6 + $0x1c] sm:$0xf]
    %v285 = vld [vmem:[#allocation6 + $0x20] sm:$0xf]
    %v286 = vld [vmem:[#allocation6 + $0x24] sm:$0xf]
    %v287 = vld [vmem:[#allocation6 + $0x28] sm:$0xf]
    %v288 = vld [vmem:[#allocation6 + $0x2c] sm:$0xf]
    %v289 = vld [vmem:[#allocation6 + $0x30] sm:$0xf]
    %v290 = vld [vmem:[#allocation6 + $0x34] sm:$0xf]
    %v291 = vld [vmem:[#allocation6 + $0x38] sm:$0xf]
    %v292 = vld [vmem:[#allocation6 + $0x3c] sm:$0xf]
    %v293 = vld [vmem:[%s4] sm:$0x1]
    %v295 = vperm.slane %v293, 0
    %v313 = vunpack.c.l.b16 %v277
    %v314 = vunpack.c.l.b16 %v278
    %v315 = vunpack.c.l.b16 %v279
    %v316 = vunpack.c.l.b16 %v280
    %v317 = vunpack.c.l.b16 %v281
    %v318 = vunpack.c.l.b16 %v282
    %v319 = vunpack.c.l.b16 %v283
    %v320 = vunpack.c.l.b16 %v284
    %v321 = vunpack.c.l.b16 %v285
    %v322 = vunpack.c.l.b16 %v286
    %v323 = vunpack.c.l.b16 %v287
    %v324 = vunpack.c.l.b16 %v288
    %v325 = vunpack.c.l.b16 %v289
    %v326 = vunpack.c.l.b16 %v290
    %v327 = vunpack.c.l.b16 %v291
    %v328 = vunpack.c.l.b16 %v292
    %v329 = vpack.c.b16 %v314, %v313
    %v330 = vpack.c.b16 %v316, %v315
    %v331 = vpack.c.b16 %v318, %v317
    %v332 = vpack.c.b16 %v320, %v319
    %v333 = vpack.c.b16 %v322, %v321
    %v334 = vpack.c.b16 %v324, %v323
    %v335 = vpack.c.b16 %v326, %v325
    %v336 = vpack.c.b16 %v328, %v327
    %345 = vmatpush.bf16.msra.mxu0 %v336
    %346 = vmatpush.bf16.msra.mxu0 %v335
    %347 = vmatpush.bf16.msra.mxu0 %v334
    %348 = vmatpush.bf16.msra.mxu0 %v333
    %349 = vmatpush.bf16.msra.mxu0 %v332
    %350 = vmatpush.bf16.msra.mxu0 %v331
    %351 = vmatpush.bf16.msra.mxu0 %v330
    %352 = vmatpush.bf16.msra.mxu0 %v329
    %353 = vmatmul.bf16.gmra.mxu0 %v275
    %v354 = vpop.f32.mrf.mxu0
    %v355 = vadd.f32 %v295, %v354
    %v356 = vpop.f32.mrf.mxu0
    %v357 = vadd.f32 %v295, %v356
    %358 = vmatmul.bf16.gmra.mxu0 %v276
    %v359 = vpop.f32.mrf.mxu0
    %v360 = vadd.f32 %v295, %v359
    %v361 = vpop.f32.mrf.mxu0
    %v362 = vadd.f32 %v295, %v361
    %363 = vdwg.mxu0
    %v364 = vmax.f32 %v355, 0.0
    %v365 = vmax.f32 %v357, 0.0
    %v366 = vmax.f32 %v360, 0.0
    %v367 = vmax.f32 %v362, 0.0
    %v368 = vpack.c.bf16 %v365, %v364
    %v369 = vpack.c.bf16 %v367, %v366
    %v370 = vld [vmem:[#allocation7] sm:$0xf]
    %v371 = vld [vmem:[#allocation7 + $0x4] sm:$0xf]
    %v372 = vld [vmem:[#allocation7 + $0x8] sm:$0xf]
    %v373 = vld [vmem:[#allocation7 + $0xc] sm:$0xf]
    %v374 = vld [vmem:[#allocation7 + $0x10] sm:$0xf]
    %v375 = vld [vmem:[#allocation7 + $0x14] sm:$0xf]
    %v376 = vld [vmem:[#allocation7 + $0x18] sm:$0xf]
    %v377 = vld [vmem:[#allocation7 + $0x1c] sm:$0xf]
    %v378 = vld [vmem:[#allocation7 + $0x20] sm:$0xf]
    %v379 = vld [vmem:[#allocation7 + $0x24] sm:$0xf]
    %v380 = vld [vmem:[#allocation7 + $0x28] sm:$0xf]
    %v381 = vld [vmem:[#allocation7 + $0x2c] sm:$0xf]
    %v382 = vld [vmem:[#allocation7 + $0x30] sm:$0xf]
    %v383 = vld [vmem:[#allocation7 + $0x34] sm:$0xf]
    %v384 = vld [vmem:[#allocation7 + $0x38] sm:$0xf]
    %v385 = vld [vmem:[#allocation7 + $0x3c] sm:$0xf]
    %v386 = vld [vmem:[%s6] sm:$0x1]
    %v388 = vperm.slane %v386, 0
    %v406 = vunpack.c.l.b16 %v370
    %v407 = vunpack.c.l.b16 %v371
    %v408 = vunpack.c.l.b16 %v372
    %v409 = vunpack.c.l.b16 %v373
    %v410 = vunpack.c.l.b16 %v374
    %v411 = vunpack.c.l.b16 %v375
    %v412 = vunpack.c.l.b16 %v376
    %v413 = vunpack.c.l.b16 %v377
    %v414 = vunpack.c.l.b16 %v378
    %v415 = vunpack.c.l.b16 %v379
    %v416 = vunpack.c.l.b16 %v380
    %v417 = vunpack.c.l.b16 %v381
    %v418 = vunpack.c.l.b16 %v382
    %v419 = vunpack.c.l.b16 %v383
    %v420 = vunpack.c.l.b16 %v384
    %v421 = vunpack.c.l.b16 %v385
    %v422 = vpack.c.b16 %v407, %v406
    %v423 = vpack.c.b16 %v409, %v408
    %v424 = vpack.c.b16 %v411, %v410
    %v425 = vpack.c.b16 %v413, %v412
    %v426 = vpack.c.b16 %v415, %v414
    %v427 = vpack.c.b16 %v417, %v416
    %v428 = vpack.c.b16 %v419, %v418
    %v429 = vpack.c.b16 %v421, %v420
    %438 = vmatpush.bf16.msra.mxu0 %v429
    %439 = vmatpush.bf16.msra.mxu0 %v428
    %440 = vmatpush.bf16.msra.mxu0 %v427
    %441 = vmatpush.bf16.msra.mxu0 %v426
    %442 = vmatpush.bf16.msra.mxu0 %v425
    %443 = vmatpush.bf16.msra.mxu0 %v424
    %444 = vmatpush.bf16.msra.mxu0 %v423
    %445 = vmatpush.bf16.msra.mxu0 %v422
    %446 = vmatmul.bf16.gmra.mxu0 %v368
    %v447 = vpop.f32.mrf.mxu0
    %v448 = vadd.f32 %v388, %v447
    %v449 = vpop.f32.mrf.mxu0
    %v450 = vadd.f32 %v388, %v449
    %451 = vmatmul.bf16.gmra.mxu0 %v369
    %v452 = vpop.f32.mrf.mxu0
    %v453 = vadd.f32 %v388, %v452
    %v454 = vpop.f32.mrf.mxu0
    %v455 = vadd.f32 %v388, %v454
    %456 = vdwg.mxu0
    %v457 = vpack.c.bf16 %v448, %v448
    %v458 = vpack.c.bf16 %v450, %v450
    %v459 = vpack.c.bf16 %v453, %v453
    %v460 = vpack.c.bf16 %v455, %v455
    %461 = vst [vmem:[%s7] sm:$0xf] %v457
    %462 = vst [vmem:[%s7 + $0x4] sm:$0xf] %v458
    %463 = vst [vmem:[%s7 + $0x8] sm:$0xf] %v459
    %464 = vst [vmem:[%s7 + $0xc] sm:$0xf] %v460
    // Predicated region
    $region46: #{_mlp_pallas.1} parent=1 // pred_check
      _
    $region47: #{_mlp_pallas.1} parent=1 // pred_check_branch
      %466 = sbr.rel (0) target = $region49
    $region48: #{_mlp_pallas.1} parent=1 // pred_region
      _
    $region49: #{_mlp_pallas.1} parent=1 // pred_fallthru
      _
    // Predicated region
    $region50: #{_mlp_pallas.1} parent=1 // pred_check
      _
    $region51: #{_mlp_pallas.1} parent=1 // pred_check_branch
      %468 = sbr.rel (0) target = $region53
    $region52: #{_mlp_pallas.1} parent=1 // pred_region
      _
    $region53: #{_mlp_pallas.1} parent=1 // pred_fallthru
      _
    %469 = vsyncpa [#allocation3], 1
    %470 = vsyncpa [#allocation5], 1
    %471 = vsyncpa [#allocation8], 1

</llo_original>
